<compile_context>
chip_gen: v5e
topology: v5e:2x2
jax: 0.10.0
libtpu: 0.0.40
codegen_flags: <defaults>
</compile_context>

<pallas_src>
import jax
import jax.numpy as jnp
import numpy as np
from jax.experimental import pallas as pl
from jax.experimental.pallas import tpu as pltpu


# ---------------------------------------------------------------------------
# Fused CBAM kernel (one grid step = Bblk batches, all scratch-free)
# ---------------------------------------------------------------------------
def _cbam_kernel(x_ref, w1_ref, w2_ref, t_ref, avg_ref, bsa_ref, o_ref):
    # x_ref:   (Bblk, C, HWp)  lane-dense feature block (VMEM)
    # w1_ref:  (Cr, C)  w2_ref: (C, Cr)   SE 1x1-conv weights (VMEM)
    # t_ref:   (2, HWp, HWp)   dense Toeplitz matrices of the 7x7 conv (VMEM)
    # avg_ref: (HWp, 1)        1/HW on valid spatial lanes, 0 on padded lanes
    # bsa_ref: (1,)            7x7 conv bias (SMEM scalar)
    # o_ref:   (Bblk, C, HWp)
    bblk, C, HWp = x_ref.shape
    f32 = jnp.float32
    inv_c = 1.0 / C

    w1 = w1_ref[...].astype(f32)                       # (Cr, C)
    w2 = w2_ref[...].astype(f32)                       # (C, Cr)
    avg_v = avg_ref[...]                               # (HWp, 1) masked 1/HW
    mean_row = jnp.full((1, C), inv_c, f32)            # channel-mean weights (MXU lhs)

    # ---- pass 1: global max / avg pooling, assembled in registers (no scratch) ----
    max_cols = []
    avg_cols = []
    for b in range(bblk):
        xb = x_ref[b].astype(f32)                                        # (C, HWp)
        max_cols.append(jnp.max(xb, axis=1, keepdims=True))              # (C, 1) VPU/XLU
        avg_cols.append(jnp.dot(xb, avg_v, preferred_element_type=f32))  # (C, 1) MXU
    pooled = jnp.concatenate(max_cols + avg_cols, axis=1)                # (C, 2*Bblk)

    # ---- shared SE MLP, fused over all 2*Bblk pooled columns (one matmul pair) ----
    h = jnp.maximum(jnp.dot(w1, pooled, preferred_element_type=f32), 0.0)  # (Cr, 2B)
    y = jnp.dot(w2, h, preferred_element_type=f32)                          # (C, 2B)
    ca = jax.nn.sigmoid(y[:, :bblk] + y[:, bblk:])                          # (C, Bblk)

    # ---- pass 2: channel-gated spatial stats, assembled in registers ----
    smax_rows = []
    smean_rows = []
    for b in range(bblk):
        out1 = x_ref[b].astype(f32) * ca[:, b:b + 1]                     # (C, HWp)
        smax_rows.append(jnp.max(out1, axis=0, keepdims=True))           # (1, HWp) VPU/XLU
        smean_rows.append(jnp.dot(mean_row, out1,                        # (1, HWp) MXU
                                  preferred_element_type=f32))
    smax = jnp.concatenate(smax_rows, axis=0)                            # (Bblk, HWp)
    smean = jnp.concatenate(smean_rows, axis=0)                          # (Bblk, HWp)

    # ---- 7x7 spatial conv (2->1, zero pad, bias) as dense Toeplitz matmuls (MXU) ----
    conv = (jnp.dot(smax, t_ref[0], preferred_element_type=f32)
            + jnp.dot(smean, t_ref[1], preferred_element_type=f32)
            + bsa_ref[0])                                                # (Bblk, HWp)
    sa = jax.nn.sigmoid(conv)

    # ---- pass 3: apply both gates, lane-dense store (recompute x*ca: cheaper than
    #      an extra store+reload pass since vst is the narrowest slot) ----
    for b in range(bblk):
        o_ref[b] = (x_ref[b].astype(f32) * ca[:, b:b + 1]
                    * sa[b:b + 1, :]).astype(o_ref.dtype)


# ---------------------------------------------------------------------------
# Dense Toeplitz matrices of the KSxKS conv (trace-time glue, tiny):
#   T[ci, r*W + c, i*W + j] = wsa[0, ci, r-i+P, c-j+P]   (0 where the tap falls
#   outside the kernel, which also encodes the zero padding of size P).
# Rows/cols for padded spatial lanes (>= HW) are zero.
# ---------------------------------------------------------------------------
def _build_conv_matrices(wsa, H, W, HWp):
    KS = wsa.shape[-1]
    P = KS // 2
    HW = H * W
    dr = jnp.arange(H)[:, None] - jnp.arange(H)[None, :] + P             # (H, H)
    dc = jnp.arange(W)[:, None] - jnp.arange(W)[None, :] + P             # (W, W)
    valid_r = (dr >= 0) & (dr < KS)
    valid_c = (dc >= 0) & (dc < KS)
    drc = jnp.clip(dr, 0, KS - 1)
    dcc = jnp.clip(dc, 0, KS - 1)
    # taps[ci, r, i, c, j] = wsa[0, ci, r-i+P, c-j+P]
    taps = wsa[0][:, drc[:, :, None, None], dcc[None, None, :, :]]       # (2,H,H,W,W)
    mask = (valid_r[:, :, None, None] & valid_c[None, None, :, :]).astype(wsa.dtype)
    taps = taps * mask[None]
    T = taps.transpose(0, 1, 3, 2, 4).reshape(2, HW, HW).astype(jnp.float32)
    if HWp != HW:
        T = jnp.pad(T, ((0, 0), (0, HWp - HW), (0, HWp - HW)))
    return T


# ---------------------------------------------------------------------------
# Wrapper
# ---------------------------------------------------------------------------
def cbam_forward(x, w1, w2, wsa, bsa, *, block_bytes_target=2 << 20, max_unroll=8):
    B, C, H, W = x.shape
    Cr = w1.shape[0]
    HW = H * W
    HWp = -(-HW // 128) * 128                     # next multiple of 128 (lane-dense)

    x2 = x.reshape(B, C, HW)
    if HWp != HW:
        # Pad spatial lanes with a large finite negative so the channel max-pool is
        # unaffected; avg_vec / Toeplitz rows are zero there so means & the 7x7 conv
        # only see the true HW.  (Costs an extra HBM copy -> only done when needed.)
        x2 = jnp.pad(x2, ((0, 0), (0, 0), (0, HWp - HW)),
                     constant_values=np.asarray(-1e30, dtype=x.dtype))

    T = _build_conv_matrices(wsa, H, W, HWp)                              # (2, HWp, HWp)
    avg_v = ((jnp.arange(HWp) < HW).astype(jnp.float32) / HW)[:, None]    # (HWp, 1)
    bsa_f = bsa.astype(jnp.float32).reshape(1)

    # ---- batch block: big enough to amortize the ~0.35us per-grid-step overhead,
    # but keep >= 4 "parallel" grid steps when possible (2 TCs on v7x) and cap the
    # per-block unroll so vreg pressure / code size stay bounded.
    per_batch_f32 = C * HWp * 4
    cap_steps = max(1, B // 4 if B >= 4 else B // 2)
    bblk = max(1, min(cap_steps, max_unroll,
                      max(1, block_bytes_target // per_batch_f32)))
    while B % bblk:
        bblk -= 1
    grid = (B // bblk,)

    # ---- explicit VMEM budget: double-buffered in/out blocks + T + f32 temps.
    blk_bytes = bblk * C * HWp * x.dtype.itemsize
    t_bytes = 2 * HWp * HWp * 4
    est = (4 * blk_bytes + 2 * t_bytes
           + 6 * C * HWp * 4 + 6 * bblk * HWp * 4 + (2 << 20))
    vmem_limit = int(min(max(est, 32 << 20), 48 << 20))   # safe on v5e/v6e/v7x

    out2 = pl.pallas_call(
        _cbam_kernel,
        out_shape=jax.ShapeDtypeStruct((B, C, HWp), x.dtype),
        grid=grid,
        in_specs=[
            pl.BlockSpec((bblk, C, HWp), lambda i: (i, 0, 0)),
            pl.BlockSpec((Cr, C), lambda i: (0, 0)),
            pl.BlockSpec((C, Cr), lambda i: (0, 0)),
            pl.BlockSpec((2, HWp, HWp), lambda i: (0, 0, 0)),
            pl.BlockSpec((HWp, 1), lambda i: (0, 0)),
            pl.BlockSpec(memory_space=pltpu.MemorySpace.SMEM),
        ],
        out_specs=pl.BlockSpec((bblk, C, HWp), lambda i: (i, 0, 0)),
        compiler_params=pltpu.CompilerParams(
            dimension_semantics=("parallel",),
            vmem_limit_bytes=vmem_limit,
        ),
    )(x2, w1, w2, T, avg_v, bsa_f)

    if HWp != HW:
        out2 = out2[:, :, :HW]
    return out2.reshape(B, C, H, W)


# ---------------------------------------------------------------------------
# Pure-JAX reference (for correctness check)
# ---------------------------------------------------------------------------
def cbam_ref(x, w1, w2, wsa, bsa):
    maxp = jnp.max(x, axis=(2, 3))                  # (B, C)
    avgp = jnp.mean(x, axis=(2, 3))                 # (B, C)

    def se(v):
        h = jnp.maximum(v @ w1.T, 0.0)
        return h @ w2.T

    ca = jax.nn.sigmoid(se(maxp) + se(avgp))[:, :, None, None]
    out1 = x * ca
    smax = jnp.max(out1, axis=1, keepdims=True)
    smean = jnp.mean(out1, axis=1, keepdims=True)
    maps = jnp.concatenate([smax, smean], axis=1)   # (B, 2, H, W)
    P = wsa.shape[-1] // 2
    conv = jax.lax.conv_general_dilated(
        maps, wsa, window_strides=(1, 1), padding=[(P, P), (P, P)],
        dimension_numbers=("NCHW", "OIHW", "NCHW"))
    sa = jax.nn.sigmoid(conv + bsa.reshape(1, 1, 1, 1))
    return out1 * sa


if __name__ == "__main__":
    def run_case(B, C, R, H, W, KS, seed=0):
        Cr = max(1, C // R)
        key = jax.random.PRNGKey(seed)
        k1, k2, k3, k4, kx = jax.random.split(key, 5)
        # deterministic synthetic parameters (shapes from the module's __init__)
        w1 = jax.random.normal(k1, (Cr, C), jnp.float32) * (2.0 / C) ** 0.5   # 1x1 C->Cr, no bias
        w2 = jax.random.normal(k2, (C, Cr), jnp.float32) * (2.0 / Cr) ** 0.5  # 1x1 Cr->C, no bias
        wsa = jax.random.normal(k3, (1, 2, KS, KS), jnp.float32) * 0.1        # 7x7 conv 2->1
        bsa = jax.random.normal(k4, (1,), jnp.float32) * 0.1                  # its bias
        x = jax.random.normal(kx, (B, C, H, W), jnp.float32)

        out = jax.block_until_ready(jax.jit(cbam_forward)(x, w1, w2, wsa, bsa))
        ref = jax.block_until_ready(cbam_ref(x, w1, w2, wsa, bsa))
        np.testing.assert_allclose(np.asarray(out), np.asarray(ref),
                                   rtol=1e-4, atol=1e-4)

    # primary small shape (bblk=1, HW already a multiple of 128)
    run_case(B=2, C=64, R=16, H=16, W=16, KS=7)
    # batched + lane-padded path (bblk=2 > 1, HW=144 padded to 256)
    run_case(B=8, C=64, R=16, H=12, W=12, KS=7)

    print("KERNEL_OK")
</pallas_src>

<mosaic_0001>
module attributes {stable_mosaic.version = 11 : i64} {
  func.func @_cbam_kernel(%arg0: i32, %arg1: memref<1x64x256xf32, #tpu.memory_space<vmem>>, %arg2: memref<4x64xf32, #tpu.memory_space<vmem>>, %arg3: memref<64x4xf32, #tpu.memory_space<vmem>>, %arg4: memref<2x256x256xf32, #tpu.memory_space<vmem>>, %arg5: memref<256x1xf32, #tpu.memory_space<vmem>>, %arg6: memref<1xf32, #tpu.memory_space<smem>>, %arg7: memref<1x64x256xf32, #tpu.memory_space<vmem>>) attributes {dimension_semantics = [#tpu.dimension_semantics<parallel>], iteration_bounds = array<i64: 2>, scalar_prefetch = 0 : i64, scratch_operands = 0 : i64, tpu.core_type = #tpu.core_type<tc>, window_params = [{transform_indices = @transform_0, window_bounds = array<i64: 1, 64, 256>}, {pipeline_mode = #tpu.pipeline_mode<synchronous>, transform_indices = @transform_1, window_bounds = array<i64: 4, 64>}, {pipeline_mode = #tpu.pipeline_mode<synchronous>, transform_indices = @transform_2, window_bounds = array<i64: 64, 4>}, {pipeline_mode = #tpu.pipeline_mode<synchronous>, transform_indices = @transform_3, window_bounds = array<i64: 2, 256, 256>}, {pipeline_mode = #tpu.pipeline_mode<synchronous>, transform_indices = @transform_4, window_bounds = array<i64: 256, 1>}, {transform_indices = @transform_5, window_bounds = array<i64: 1>}, {transform_indices = @transform_6, window_bounds = array<i64: 1, 64, 256>}]} {
    %c0 = arith.constant 0 : index
    %c0_0 = arith.constant 0 : index
    %0 = vector.load %arg2[%c0, %c0_0] : memref<4x64xf32, #tpu.memory_space<vmem>>, vector<4x64xf32>
    %c0_1 = arith.constant 0 : index
    %c0_2 = arith.constant 0 : index
    %1 = vector.load %arg3[%c0_1, %c0_2] : memref<64x4xf32, #tpu.memory_space<vmem>>, vector<64x4xf32>
    %c0_3 = arith.constant 0 : index
    %c0_4 = arith.constant 0 : index
    %2 = vector.load %arg5[%c0_3, %c0_4] : memref<256x1xf32, #tpu.memory_space<vmem>>, vector<256x1xf32>
    %cst = arith.constant 1.562500e-02 : f32
    %3 = vector.broadcast %cst : f32 to vector<1x64xf32>
    %c0_5 = arith.constant 0 : index
    %c0_6 = arith.constant 0 : index
    %c0_7 = arith.constant 0 : index
    %4 = vector.load %arg1[%c0_5, %c0_6, %c0_7] : memref<1x64x256xf32, #tpu.memory_space<vmem>>, vector<1x64x256xf32>
    %5 = vector.shape_cast %4 : vector<1x64x256xf32> to vector<64x256xf32>
    %cst_8 = arith.constant dense<0xFF800000> : vector<64xf32>
    %6 = vector.multi_reduction <maximumf>, %5, %cst_8 [1] : vector<64x256xf32> to vector<64xf32>
    %7 = vector.shape_cast %6 : vector<64xf32> to vector<64x1xf32>
    %cst_9 = arith.constant dense<0.000000e+00> : vector<64x1xf32>
    %8 = tpu.matmul %5, %2, %cst_9 {dimension_numbers = #tpu.dot_dimension_numbers<[1], [0], [0], [1], [0, 0, 1, 1], [], []>} : vector<64x256xf32>, vector<256x1xf32>, vector<64x1xf32> -> vector<64x1xf32>
    %9 = tpu.concatenate %7, %8 in 1 : vector<64x1xf32>, vector<64x1xf32> -> vector<64x2xf32>
    %cst_10 = arith.constant dense<0.000000e+00> : vector<4x2xf32>
    %10 = tpu.matmul %0, %9, %cst_10 {dimension_numbers = #tpu.dot_dimension_numbers<[1], [0], [0], [1], [0, 0, 1, 1], [], []>} : vector<4x64xf32>, vector<64x2xf32>, vector<4x2xf32> -> vector<4x2xf32>
    %cst_11 = arith.constant 0.000000e+00 : f32
    %11 = vector.broadcast %cst_11 : f32 to vector<4x2xf32>
    %12 = arith.maximumf %10, %11 : vector<4x2xf32>
    %cst_12 = arith.constant dense<0.000000e+00> : vector<64x2xf32>
    %13 = tpu.matmul %1, %12, %cst_12 {dimension_numbers = #tpu.dot_dimension_numbers<[1], [0], [0], [1], [0, 0, 1, 1], [], []>} : vector<64x4xf32>, vector<4x2xf32>, vector<64x2xf32> -> vector<64x2xf32>
    %14 = vector.extract_strided_slice %13 {offsets = [0, 0], sizes = [64, 1], strides = [1, 1]} : vector<64x2xf32> to vector<64x1xf32>
    %15 = vector.extract_strided_slice %13 {offsets = [0, 1], sizes = [64, 1], strides = [1, 1]} : vector<64x2xf32> to vector<64x1xf32>
    %16 = arith.addf %14, %15 : vector<64x1xf32>
    %17 = arith.negf %16 : vector<64x1xf32>
    %18 = math.exp %17 : vector<64x1xf32>
    %cst_13 = arith.constant 1.000000e+00 : f32
    %19 = vector.broadcast %cst_13 : f32 to vector<64x1xf32>
    %20 = arith.addf %19, %18 : vector<64x1xf32>
    %21 = arith.divf %19, %20 : vector<64x1xf32>
    %c0_14 = arith.constant 0 : index
    %c0_15 = arith.constant 0 : index
    %c0_16 = arith.constant 0 : index
    %22 = vector.load %arg1[%c0_14, %c0_15, %c0_16] : memref<1x64x256xf32, #tpu.memory_space<vmem>>, vector<1x64x256xf32>
    %23 = vector.shape_cast %22 : vector<1x64x256xf32> to vector<64x256xf32>
    %24 = vector.broadcast %21 : vector<64x1xf32> to vector<64x256xf32>
    %25 = arith.mulf %23, %24 : vector<64x256xf32>
    %cst_17 = arith.constant dense<0xFF800000> : vector<256xf32>
    %26 = vector.multi_reduction <maximumf>, %25, %cst_17 [0] : vector<64x256xf32> to vector<256xf32>
    %27 = vector.shape_cast %26 : vector<256xf32> to vector<1x256xf32>
    %cst_18 = arith.constant dense<0.000000e+00> : vector<1x256xf32>
    %28 = tpu.matmul %3, %25, %cst_18 {dimension_numbers = #tpu.dot_dimension_numbers<[1], [0], [0], [1], [0, 0, 1, 1], [], []>} : vector<1x64xf32>, vector<64x256xf32>, vector<1x256xf32> -> vector<1x256xf32>
    %c0_19 = arith.constant 0 : index
    %c0_20 = arith.constant 0 : index
    %c0_21 = arith.constant 0 : index
    %29 = vector.load %arg4[%c0_19, %c0_20, %c0_21] : memref<2x256x256xf32, #tpu.memory_space<vmem>>, vector<1x256x256xf32>
    %30 = vector.shape_cast %29 : vector<1x256x256xf32> to vector<256x256xf32>
    %cst_22 = arith.constant dense<0.000000e+00> : vector<1x256xf32>
    %31 = tpu.matmul %27, %30, %cst_22 {dimension_numbers = #tpu.dot_dimension_numbers<[1], [0], [0], [1], [0, 0, 1, 1], [], []>} : vector<1x256xf32>, vector<256x256xf32>, vector<1x256xf32> -> vector<1x256xf32>
    %c1 = arith.constant 1 : index
    %c0_23 = arith.constant 0 : index
    %c0_24 = arith.constant 0 : index
    %32 = vector.load %arg4[%c1, %c0_23, %c0_24] : memref<2x256x256xf32, #tpu.memory_space<vmem>>, vector<1x256x256xf32>
    %33 = vector.shape_cast %32 : vector<1x256x256xf32> to vector<256x256xf32>
    %cst_25 = arith.constant dense<0.000000e+00> : vector<1x256xf32>
    %34 = tpu.matmul %28, %33, %cst_25 {dimension_numbers = #tpu.dot_dimension_numbers<[1], [0], [0], [1], [0, 0, 1, 1], [], []>} : vector<1x256xf32>, vector<256x256xf32>, vector<1x256xf32> -> vector<1x256xf32>
    %35 = arith.addf %31, %34 : vector<1x256xf32>
    %c0_26 = arith.constant 0 : index
    %36 = memref.load %arg6[%c0_26] : memref<1xf32, #tpu.memory_space<smem>>
    %37 = vector.broadcast %36 : f32 to vector<1x256xf32>
    %38 = arith.addf %35, %37 : vector<1x256xf32>
    %39 = arith.negf %38 : vector<1x256xf32>
    %40 = math.exp %39 : vector<1x256xf32>
    %cst_27 = arith.constant 1.000000e+00 : f32
    %41 = vector.broadcast %cst_27 : f32 to vector<1x256xf32>
    %42 = arith.addf %41, %40 : vector<1x256xf32>
    %43 = arith.divf %41, %42 : vector<1x256xf32>
    %c0_28 = arith.constant 0 : index
    %c0_29 = arith.constant 0 : index
    %c0_30 = arith.constant 0 : index
    %44 = vector.load %arg1[%c0_28, %c0_29, %c0_30] : memref<1x64x256xf32, #tpu.memory_space<vmem>>, vector<1x64x256xf32>
    %45 = vector.shape_cast %44 : vector<1x64x256xf32> to vector<64x256xf32>
    %46 = vector.broadcast %21 : vector<64x1xf32> to vector<64x256xf32>
    %47 = arith.mulf %45, %46 : vector<64x256xf32>
    %48 = vector.broadcast %43 : vector<1x256xf32> to vector<64x256xf32>
    %49 = arith.mulf %47, %48 : vector<64x256xf32>
    %c0_31 = arith.constant 0 : index
    %c0_32 = arith.constant 0 : index
    %c0_33 = arith.constant 0 : index
    %50 = vector.load %arg7[%c0_31, %c0_32, %c0_33] : memref<1x64x256xf32, #tpu.memory_space<vmem>>, vector<1x64x256xf32>
    %51 = vector.shape_cast %50 : vector<1x64x256xf32> to vector<64x256xf32>
    %52 = vector.shape_cast %49 : vector<64x256xf32> to vector<1x64x256xf32>
    tpu.vector_store %arg7[%c0_31, %c0_32, %c0_33], %52 {strides = array<i32>} : memref<1x64x256xf32, #tpu.memory_space<vmem>>, vector<1x64x256xf32>,
    return
  }
  func.func @transform_0(%arg0: i32) -> (i32, i32, i32) {
    %c0_i32 = arith.constant 0 : i32
    %c0_i32_0 = arith.constant 0 : i32
    %c0_i32_1 = arith.constant 0 : i32
    return %arg0, %c0_i32, %c0_i32_0 : i32, i32, i32
  }
  func.func @transform_1(%arg0: i32) -> (i32, i32) {
    %c0_i32 = arith.constant 0 : i32
    %c0_i32_0 = arith.constant 0 : i32
    %c0_i32_1 = arith.constant 0 : i32
    return %c0_i32, %c0_i32_0 : i32, i32
  }
  func.func @transform_2(%arg0: i32) -> (i32, i32) {
    %c0_i32 = arith.constant 0 : i32
    %c0_i32_0 = arith.constant 0 : i32
    %c0_i32_1 = arith.constant 0 : i32
    return %c0_i32, %c0_i32_0 : i32, i32
  }
  func.func @transform_3(%arg0: i32) -> (i32, i32, i32) {
    %c0_i32 = arith.constant 0 : i32
    %c0_i32_0 = arith.constant 0 : i32
    %c0_i32_1 = arith.constant 0 : i32
    %c0_i32_2 = arith.constant 0 : i32
    return %c0_i32, %c0_i32_0, %c0_i32_1 : i32, i32, i32
  }
  func.func @transform_4(%arg0: i32) -> (i32, i32) {
    %c0_i32 = arith.constant 0 : i32
    %c0_i32_0 = arith.constant 0 : i32
    %c0_i32_1 = arith.constant 0 : i32
    return %c0_i32, %c0_i32_0 : i32, i32
  }
  func.func @transform_5(%arg0: i32) -> i32 {
    %c0_i32 = arith.constant 0 : i32
    %c0_i32_0 = arith.constant 0 : i32
    return %c0_i32 : i32
  }
  func.func @transform_6(%arg0: i32) -> (i32, i32, i32) {
    %c0_i32 = arith.constant 0 : i32
    %c0_i32_0 = arith.constant 0 : i32
    %c0_i32_1 = arith.constant 0 : i32
    return %arg0, %c0_i32, %c0_i32_0 : i32, i32, i32
  }
}

</mosaic_0001>

<llo_original>
// kernel: cbam_forward.1
$region0: #{cbam_forward.1}
  #allocation0 [shape = 'u32[]', space=smem, size = 0x4, offset = 0x4, fixed_abs, tag = 'smem constant byte address 0x4 - core index']
  #allocation1 [shape = 'u32[72,128]{1,0:T(1,128)}', space=vmem, size = 0x9000, scoped, tag = 'internal scratch']
  #allocation2 [shape = 'f32[1]{0:T(128)S(6)}', space=smem, size = 0x200, scoped, tag = 'scoped memory for cbam_forward.1']
  %s0 = inlined_call_operand.vmem [shape: f32[2,64,256], index: 0, kind: input, shape index: {}]
  %s1 = inlined_call_operand.vmem [shape: f32[4,64], index: 1, kind: input, shape index: {}]
  %s2 = inlined_call_operand.vmem [shape: f32[64,4], index: 2, kind: input, shape index: {}]
  %s3 = inlined_call_operand.vmem [shape: f32[2,256,256], index: 3, kind: input, shape index: {}]
  %s4 = inlined_call_operand.vmem [shape: f32[256,1], index: 4, kind: input, shape index: {}]
  %s5 = inlined_call_operand.<no memory space> [shape: f32[1], index: 5, kind: input, shape index: {}]
  %s6 = inlined_call_operand.vmem [shape: f32[2,64,256], index: 6, kind: output, shape index: {}]
  %s7 = sld [smem:[#allocation0]]
  $region57: #{cbam_forward.1} parent=0
    _
  %s9 = ssub.s32 1, %s7
  %s10 = scalar_select 0, %s9, %s7
  %11 = sst [smem:[#allocation2]] %s5
  loop: start=0, step=1, limit=4
  $region2: #{cbam_forward.1} parent=0 // loop_pre_header
    _
  $region3: #{cbam_forward.1} parent=0 // loop_header
    %s13 = sphi 0, %s17
    %p14 = scmp.ge.s32.totalorder %s13, 4
    %s23 = sphi 0, %s25
    %s26 = sphi 0, %s23
    %s27 = sphi 0, %s26
    %s43 = sphi 0, %s27
    %s47 = sphi 0, %s47
    %s49 = sphi 0, %s47
    %s50 = sphi 0, %s49
    %s64 = sphi 0, %s50
    %s68 = sphi 0, %s68
    %s70 = sphi 0, %s68
    %s71 = sphi 0, %s70
    %s85 = sphi 0, %s71
    %s89 = sphi 0, %s89
    %s91 = sphi 0, %s89
    %s92 = sphi 0, %s91
    %s106 = sphi 0, %s92
    %s110 = sphi 0, %s110
    %s112 = sphi 0, %s110
    %s113 = sphi 0, %s112
    %s127 = sphi 0, %s113
    %s131 = sphi 0, %s131
    %s133 = sphi 0, %s131
    %s134 = sphi 0, %s133
    %s148 = sphi 0, %s134
    %s154 = sphi 0, %s156
    %s157 = sphi 0, %s154
    %s158 = sphi 0, %s157
    %s174 = sphi 0, %s158
  $region4: #{cbam_forward.1} parent=0 // loop_header_branch
    %16 = sbr.rel (%p14) target = $region8
  $region5: #{cbam_forward.1} parent=0 // loop_body
    %s18 = ssub.s32 %s13, 1
    %s19 = ssub.s32 %s13, 2
    %s20 = sadd.s32 %s13, 1
    %s21 = ssub.s32 %s13, %s20
    %p22 = scmp.eq.s32.totalorder %s21, 0
    %s24 = sadd.s32 %s23, 1
    %s25 = scalar_select %p22, %s23, %s24
    %p28 = pneg %p22
    %p29 = scmp.eq.s32.totalorder %s13, 1
    %p30 = por %p28, %p29
    %p31 = scmp.ne.s32.totalorder %s23, %s26
    %p32 = scmp.eq.s32.totalorder %s13, 0
    %p33 = por %p31, %p32
    %p34 = scmp.ne.s32.totalorder %s23, %s26
    %p35 = scmp.eq.s32.totalorder %s18, 1
    %p36 = por %p34, %p35
    %p37 = scmp.ne.s32.totalorder %s26, %s27
    %p38 = scmp.eq.s32.totalorder %s18, 0
    %p39 = por %p37, %p38
    %p40 = scmp.ne.s32.totalorder %s26, %s27
    %p41 = scmp.eq.s32.totalorder %s19, 1
    %p42 = por %p40, %p41
    %p44 = scmp.ne.s32.totalorder %s27, %s43
    %p45 = scmp.eq.s32.totalorder %s19, 0
    %p46 = por %p44, %p45
    %s48 = sadd.s32 %s47, 1
    %p51 = scmp.eq.s32.totalorder %s13, 1
    %p52 = scmp.ne.s32.totalorder %s47, %s49
    %p53 = scmp.eq.s32.totalorder %s13, 0
    %p54 = por %p52, %p53
    %p55 = scmp.ne.s32.totalorder %s47, %s49
    %p56 = scmp.eq.s32.totalorder %s18, 1
    %p57 = por %p55, %p56
    %p58 = scmp.ne.s32.totalorder %s49, %s50
    %p59 = scmp.eq.s32.totalorder %s18, 0
    %p60 = por %p58, %p59
    %p61 = scmp.ne.s32.totalorder %s49, %s50
    %p62 = scmp.eq.s32.totalorder %s19, 1
    %p63 = por %p61, %p62
    %p65 = scmp.ne.s32.totalorder %s50, %s64
    %p66 = scmp.eq.s32.totalorder %s19, 0
    %p67 = por %p65, %p66
    %s69 = sadd.s32 %s68, 1
    %p72 = scmp.eq.s32.totalorder %s13, 1
    %p73 = scmp.ne.s32.totalorder %s68, %s70
    %p74 = scmp.eq.s32.totalorder %s13, 0
    %p75 = por %p73, %p74
    %p76 = scmp.ne.s32.totalorder %s68, %s70
    %p77 = scmp.eq.s32.totalorder %s18, 1
    %p78 = por %p76, %p77
    %p79 = scmp.ne.s32.totalorder %s70, %s71
    %p80 = scmp.eq.s32.totalorder %s18, 0
    %p81 = por %p79, %p80
    %p82 = scmp.ne.s32.totalorder %s70, %s71
    %p83 = scmp.eq.s32.totalorder %s19, 1
    %p84 = por %p82, %p83
    %p86 = scmp.ne.s32.totalorder %s71, %s85
    %p87 = scmp.eq.s32.totalorder %s19, 0
    %p88 = por %p86, %p87
    %s90 = sadd.s32 %s89, 1
    %p93 = scmp.eq.s32.totalorder %s13, 1
    %p94 = scmp.ne.s32.totalorder %s89, %s91
    %p95 = scmp.eq.s32.totalorder %s13, 0
    %p96 = por %p94, %p95
    %p97 = scmp.ne.s32.totalorder %s89, %s91
    %p98 = scmp.eq.s32.totalorder %s18, 1
    %p99 = por %p97, %p98
    %p100 = scmp.ne.s32.totalorder %s91, %s92
    %p101 = scmp.eq.s32.totalorder %s18, 0
    %p102 = por %p100, %p101
    %p103 = scmp.ne.s32.totalorder %s91, %s92
    %p104 = scmp.eq.s32.totalorder %s19, 1
    %p105 = por %p103, %p104
    %p107 = scmp.ne.s32.totalorder %s92, %s106
    %p108 = scmp.eq.s32.totalorder %s19, 0
    %p109 = por %p107, %p108
    %s111 = sadd.s32 %s110, 1
    %p114 = scmp.eq.s32.totalorder %s13, 1
    %p115 = scmp.ne.s32.totalorder %s110, %s112
    %p116 = scmp.eq.s32.totalorder %s13, 0
    %p117 = por %p115, %p116
    %p118 = scmp.ne.s32.totalorder %s110, %s112
    %p119 = scmp.eq.s32.totalorder %s18, 1
    %p120 = por %p118, %p119
    %p121 = scmp.ne.s32.totalorder %s112, %s113
    %p122 = scmp.eq.s32.totalorder %s18, 0
    %p123 = por %p121, %p122
    %p124 = scmp.ne.s32.totalorder %s112, %s113
    %p125 = scmp.eq.s32.totalorder %s19, 1
    %p126 = por %p124, %p125
    %p128 = scmp.ne.s32.totalorder %s113, %s127
    %p129 = scmp.eq.s32.totalorder %s19, 0
    %p130 = por %p128, %p129
    %s132 = sadd.s32 %s131, 1
    %p135 = scmp.eq.s32.totalorder %s13, 1
    %p136 = scmp.ne.s32.totalorder %s131, %s133
    %p137 = scmp.eq.s32.totalorder %s13, 0
    %p138 = por %p136, %p137
    %p139 = scmp.ne.s32.totalorder %s131, %s133
    %p140 = scmp.eq.s32.totalorder %s18, 1
    %p141 = por %p139, %p140
    %p142 = scmp.ne.s32.totalorder %s133, %s134
    %p143 = scmp.eq.s32.totalorder %s18, 0
    %p144 = por %p142, %p143
    %p145 = scmp.ne.s32.totalorder %s133, %s134
    %p146 = scmp.eq.s32.totalorder %s19, 1
    %p147 = por %p145, %p146
    %p149 = scmp.ne.s32.totalorder %s134, %s148
    %p150 = scmp.eq.s32.totalorder %s19, 0
    %p151 = por %p149, %p150
    %s152 = ssub.s32 %s13, %s20
    %p153 = scmp.eq.s32.totalorder %s152, 0
    %s155 = sadd.s32 %s154, 1
    %s156 = scalar_select %p153, %s154, %s155
    %p159 = pneg %p153
    %p160 = scmp.eq.s32.totalorder %s13, 1
    %p161 = por %p159, %p160
    %p162 = scmp.ne.s32.totalorder %s154, %s157
    %p163 = scmp.eq.s32.totalorder %s13, 0
    %p164 = por %p162, %p163
    %p165 = scmp.ne.s32.totalorder %s154, %s157
    %p166 = scmp.eq.s32.totalorder %s18, 1
    %p167 = por %p165, %p166
    %p168 = scmp.ne.s32.totalorder %s157, %s158
    %p169 = scmp.eq.s32.totalorder %s18, 0
    %p170 = por %p168, %p169
    %p171 = scmp.ne.s32.totalorder %s157, %s158
    %p172 = scmp.eq.s32.totalorder %s19, 1
    %p173 = por %p171, %p172
    %p175 = scmp.ne.s32.totalorder %s158, %s174
    %p176 = scmp.eq.s32.totalorder %s19, 0
    %p177 = por %p175, %p176
    %p178 = scmp.le.s32.totalorder 1, %s13
    %p179 = scmp.lt.s32.totalorder %s13, 3
    %p180 = pnand %p178, %p179
    %p181 = pneg %p180
    // Predicated region
    $region9: #{cbam_forward.1} parent=5 // pred_check
      _
    $region10: #{cbam_forward.1} parent=5 // pred_check_branch
      %183 = sbr.rel (%p180) target = $region12
    $region11: #{cbam_forward.1} parent=5 // pred_region
      %s184 = ssub.s32 %s13, 1
      // Predicated region
      $region13: #{cbam_forward.1} parent=11 // pred_check
        %p185 = pneg %p60
      $region14: #{cbam_forward.1} parent=11 // pred_check_branch
        %187 = sbr.rel (%p185) target = $region16
      $region15: #{cbam_forward.1} parent=11 // pred_region
        _
      $region16: #{cbam_forward.1} parent=11 // pred_fallthru
        _
      // Predicated region
      $region17: #{cbam_forward.1} parent=11 // pred_check
        %p188 = pneg %p81
      $region18: #{cbam_forward.1} parent=11 // pred_check_branch
        %190 = sbr.rel (%p188) target = $region20
      $region19: #{cbam_forward.1} parent=11 // pred_region
        _
      $region20: #{cbam_forward.1} parent=11 // pred_fallthru
        _
      // Predicated region
      $region21: #{cbam_forward.1} parent=11 // pred_check
        %p191 = pneg %p102
      $region22: #{cbam_forward.1} parent=11 // pred_check_branch
        %193 = sbr.rel (%p191) target = $region24
      $region23: #{cbam_forward.1} parent=11 // pred_region
        _
      $region24: #{cbam_forward.1} parent=11 // pred_fallthru
        _
      // Predicated region
      $region25: #{cbam_forward.1} parent=11 // pred_check
        %p194 = pneg %p123
      $region26: #{cbam_forward.1} parent=11 // pred_check_branch
        %196 = sbr.rel (%p194) target = $region28
      $region27: #{cbam_forward.1} parent=11 // pred_region
        _
      $region28: #{cbam_forward.1} parent=11 // pred_fallthru
        _
      // Predicated region
      $region29: #{cbam_forward.1} parent=11 // pred_check
        %p197 = pneg %p144
      $region30: #{cbam_forward.1} parent=11 // pred_check_branch
        %199 = sbr.rel (%p197) target = $region32
      $region31: #{cbam_forward.1} parent=11 // pred_region
        _
      $region32: #{cbam_forward.1} parent=11 // pred_fallthru
        _
    $region12: #{cbam_forward.1} parent=5 // pred_fallthru
      _
    %p200 = scmp.lt.s32.totalorder %s13, 2
    // Predicated region
    $region33: #{cbam_forward.1} parent=5 // pred_check
      %p201 = pneg %p200
    $region34: #{cbam_forward.1} parent=5 // pred_check_branch
      %203 = sbr.rel (%p201) target = $region36
    $region35: #{cbam_forward.1} parent=5 // pred_region
      // Predicated region
      $region37: #{cbam_forward.1} parent=35 // pred_check
        %p204 = pneg %p33
      $region38: #{cbam_forward.1} parent=35 // pred_check_branch
        %206 = sbr.rel (%p204) target = $region40
      $region39: #{cbam_forward.1} parent=35 // pred_region
        %p207 = scmp.lt.s32.totalorder %s13, 1
        %s208 = scalar_select %p207, %s13, 1
        %s209 = smul.addr %s208, 16
        %s210 = smul.addr %s209, 8
        %s211 = scalar_lea.vmem %s0, %s210
      $region40: #{cbam_forward.1} parent=35 // pred_fallthru
        _
    $region36: #{cbam_forward.1} parent=5 // pred_fallthru
      _
    %p212 = scmp.le.s32.totalorder 1, %s13
    %p213 = scmp.lt.s32.totalorder %s13, 3
    %p214 = pnand %p212, %p213
    %p215 = pneg %p214
    // Predicated region
    $region41: #{cbam_forward.1} parent=5 // pred_check
      _
    $region42: #{cbam_forward.1} parent=5 // pred_check_branch
      %217 = sbr.rel (%p214) target = $region44
    $region43: #{cbam_forward.1} parent=5 // pred_region
      %s218 = ssub.s32 %s13, 1
      %p219 = scmp.lt.s32.totalorder %s18, 1
      %s220 = scalar_select %p219, %s18, 1
      %s221 = smul.addr %s220, 16
      %s222 = smul.addr %s221, 8
      %s223 = scalar_lea.vmem %s0, %s222
      %p224 = pneg %p39
      %p225 = pneg %p36
      %p226 = pneg %p60
      %p227 = pneg %p57
      %p228 = pneg %p81
      %p229 = pneg %p78
      %p230 = pneg %p102
      %p231 = pneg %p99
      %p232 = pneg %p123
      %p233 = pneg %p120
      %p234 = pneg %p144
      %p235 = pneg %p141
      %p236 = pneg %p170
      %p237 = pneg %p167
      %p238 = scmp.lt.s32.totalorder %s18, 1
      %s239 = scalar_select %p238, %s18, 1
      %s240 = smul.addr %s239, 16
      %s241 = smul.addr %s240, 8
      %s242 = scalar_lea.vmem %s6, %s241
      %p243 = scmp.lt.s32.totalorder %s18, 1
      %s244 = scalar_select %p243, %s18, 1
      %s245 = smul.addr %s244, 16
      %s246 = smul.addr %s245, 8
      %s247 = scalar_lea.vmem %s0, %s246
      %p248 = scmp.lt.s32.totalorder %s18, 1
      %s249 = scalar_select %p248, %s18, 1
      %s250 = smul.addr %s249, 16
      %s251 = smul.addr %s250, 8
      %s252 = scalar_lea.vmem %s6, %s251
      %v253 = vld [vmem:[%s1] sm:$0xf]
      %v254 = vld [vmem:[%s2] sm:$0xff]
      %v255 = vld [vmem:[%s2 + $0x8] sm:$0xff]
      %v256 = vld [vmem:[%s2 + $0x10] sm:$0xff]
      %v257 = vld [vmem:[%s2 + $0x18] sm:$0xff]
      %v258 = vld [vmem:[%s2 + $0x20] sm:$0xff]
      %v259 = vld [vmem:[%s2 + $0x28] sm:$0xff]
      %v260 = vld [vmem:[%s2 + $0x30] sm:$0xff]
      %v261 = vld [vmem:[%s2 + $0x38] sm:$0xff]
      %v262 = vld [vmem:[%s4] sm:$0xff]
      %v263 = vld [vmem:[%s4 + $0x8] sm:$0xff]
      %v264 = vld [vmem:[%s4 + $0x10] sm:$0xff]
      %v265 = vld [vmem:[%s4 + $0x18] sm:$0xff]
      %v266 = vld [vmem:[%s4 + $0x20] sm:$0xff]
      %v267 = vld [vmem:[%s4 + $0x28] sm:$0xff]
      %v268 = vld [vmem:[%s4 + $0x30] sm:$0xff]
      %v269 = vld [vmem:[%s4 + $0x38] sm:$0xff]
      %v270 = vld [vmem:[%s4 + $0x40] sm:$0xff]
      %v271 = vld [vmem:[%s4 + $0x48] sm:$0xff]
      %v272 = vld [vmem:[%s4 + $0x50] sm:$0xff]
      %v273 = vld [vmem:[%s4 + $0x58] sm:$0xff]
      %v274 = vld [vmem:[%s4 + $0x60] sm:$0xff]
      %v275 = vld [vmem:[%s4 + $0x68] sm:$0xff]
      %v276 = vld [vmem:[%s4 + $0x70] sm:$0xff]
      %v277 = vld [vmem:[%s4 + $0x78] sm:$0xff]
      %v278 = vld [vmem:[%s4 + $0x80] sm:$0xff]
      %v279 = vld [vmem:[%s4 + $0x88] sm:$0xff]
      %v280 = vld [vmem:[%s4 + $0x90] sm:$0xff]
      %v281 = vld [vmem:[%s4 + $0x98] sm:$0xff]
      %v282 = vld [vmem:[%s4 + $0xa0] sm:$0xff]
      %v283 = vld [vmem:[%s4 + $0xa8] sm:$0xff]
      %v284 = vld [vmem:[%s4 + $0xb0] sm:$0xff]
      %v285 = vld [vmem:[%s4 + $0xb8] sm:$0xff]
      %v286 = vld [vmem:[%s4 + $0xc0] sm:$0xff]
      %v287 = vld [vmem:[%s4 + $0xc8] sm:$0xff]
      %v288 = vld [vmem:[%s4 + $0xd0] sm:$0xff]
      %v289 = vld [vmem:[%s4 + $0xd8] sm:$0xff]
      %v290 = vld [vmem:[%s4 + $0xe0] sm:$0xff]
      %v291 = vld [vmem:[%s4 + $0xe8] sm:$0xff]
      %v292 = vld [vmem:[%s4 + $0xf0] sm:$0xff]
      %v293 = vld [vmem:[%s4 + $0xf8] sm:$0xff]
      %v294 = vld [vmem:[%s247] sm:$0xff]
      %v295 = vld [vmem:[%s247 + $0x8] sm:$0xff]
      %v296 = vld [vmem:[%s247 + $0x10] sm:$0xff]
      %v297 = vld [vmem:[%s247 + $0x18] sm:$0xff]
      %v298 = vld [vmem:[%s247 + $0x20] sm:$0xff]
      %v299 = vld [vmem:[%s247 + $0x28] sm:$0xff]
      %v300 = vld [vmem:[%s247 + $0x30] sm:$0xff]
      %v301 = vld [vmem:[%s247 + $0x38] sm:$0xff]
      %v302 = vld [vmem:[%s247 + $0x40] sm:$0xff]
      %v303 = vld [vmem:[%s247 + $0x48] sm:$0xff]
      %v304 = vld [vmem:[%s247 + $0x50] sm:$0xff]
      %v305 = vld [vmem:[%s247 + $0x58] sm:$0xff]
      %v306 = vld [vmem:[%s247 + $0x60] sm:$0xff]
      %v307 = vld [vmem:[%s247 + $0x68] sm:$0xff]
      %v308 = vld [vmem:[%s247 + $0x70] sm:$0xff]
      %v309 = vld [vmem:[%s247 + $0x78] sm:$0xff]
      %v310 = vmax.f32 %v294, %v295
      %311 = vmax.xlane.f32.xlu0 %v310
      %v312 = vpop.xlane.xlu0 %311
      %v313 = vmax.f32 %v296, %v297
      %314 = vmax.xlane.f32.xlu0 %v313
      %v315 = vpop.xlane.xlu0 %314
      %v316 = vmax.f32 %v298, %v299
      %317 = vmax.xlane.f32.xlu0 %v316
      %v318 = vpop.xlane.xlu0 %317
      %v319 = vmax.f32 %v300, %v301
      %320 = vmax.xlane.f32.xlu0 %v319
      %v321 = vpop.xlane.xlu0 %320
      %v322 = vmax.f32 %v302, %v303
      %323 = vmax.xlane.f32.xlu0 %v322
      %v324 = vpop.xlane.xlu0 %323
      %v325 = vmax.f32 %v304, %v305
      %326 = vmax.xlane.f32.xlu0 %v325
      %v327 = vpop.xlane.xlu0 %326
      %v328 = vmax.f32 %v306, %v307
      %329 = vmax.xlane.f32.xlu0 %v328
      %v330 = vpop.xlane.xlu0 %329
      %v331 = vmax.f32 %v308, %v309
      %332 = vmax.xlane.f32.xlu0 %v331
      %v333 = vpop.xlane.xlu0 %332
      %334 = vmatpush.msra.mxu0 %v277
      %335 = vmatpush.msra.mxu0 %v276
      %336 = vmatpush.msra.mxu0 %v275
      %337 = vmatpush.msra.mxu0 %v274
      %338 = vmatpush.msra.mxu0 %v273
      %339 = vmatpush.msra.mxu0 %v272
      %340 = vmatpush.msra.mxu0 %v271
      %341 = vmatpush.msra.mxu0 %v270
      %342 = vmatpush.msra.mxu0 %v269
      %343 = vmatpush.msra.mxu0 %v268
      %344 = vmatpush.msra.mxu0 %v267
      %345 = vmatpush.msra.mxu0 %v266
      %346 = vmatpush.msra.mxu0 %v265
      %347 = vmatpush.msra.mxu0 %v264
      %348 = vmatpush.msra.mxu0 %v263
      %349 = vmatpush.msra.mxu0 %v262
      %350 = vmatmul.f32.gmra.mxu0 %v294
      %v351 = vpop.f32.mrf.mxu0
      %v352 = vadd.f32 0.0, %v351
      %353 = vmatmul.f32.gmra.mxu0 %v296
      %v354 = vpop.f32.mrf.mxu0
      %v355 = vadd.f32 0.0, %v354
      %356 = vmatmul.f32.gmra.mxu0 %v298
      %v357 = vpop.f32.mrf.mxu0
      %v358 = vadd.f32 0.0, %v357
      %359 = vmatmul.f32.gmra.mxu0 %v300
      %v360 = vpop.f32.mrf.mxu0
      %v361 = vadd.f32 0.0, %v360
      %362 = vmatmul.f32.gmra.mxu0 %v302
      %v363 = vpop.f32.mrf.mxu0
      %v364 = vadd.f32 0.0, %v363
      %365 = vmatmul.f32.gmra.mxu0 %v304
      %v366 = vpop.f32.mrf.mxu0
      %v367 = vadd.f32 0.0, %v366
      %368 = vmatmul.f32.gmra.mxu0 %v306
      %v369 = vpop.f32.mrf.mxu0
      %v370 = vadd.f32 0.0, %v369
      %371 = vmatmul.f32.gmra.mxu0 %v308
      %v372 = vpop.f32.mrf.mxu0
      %v373 = vadd.f32 0.0, %v372
      %374 = vdwg.mxu0
      %375 = vmatpush.msra.mxu0 %v293
      %376 = vmatpush.msra.mxu0 %v292
      %377 = vmatpush.msra.mxu0 %v291
      %378 = vmatpush.msra.mxu0 %v290
      %379 = vmatpush.msra.mxu0 %v289
      %380 = vmatpush.msra.mxu0 %v288
      %381 = vmatpush.msra.mxu0 %v287
      %382 = vmatpush.msra.mxu0 %v286
      %383 = vmatpush.msra.mxu0 %v285
      %384 = vmatpush.msra.mxu0 %v284
      %385 = vmatpush.msra.mxu0 %v283
      %386 = vmatpush.msra.mxu0 %v282
      %387 = vmatpush.msra.mxu0 %v281
      %388 = vmatpush.msra.mxu0 %v280
      %389 = vmatpush.msra.mxu0 %v279
      %390 = vmatpush.msra.mxu0 %v278
      %391 = vmatmul.f32.gmra.mxu0 %v295
      %v392 = vpop.f32.mrf.mxu0
      %v393 = vadd.f32 %v352, %v392
      %394 = vmatmul.f32.gmra.mxu0 %v297
      %v395 = vpop.f32.mrf.mxu0
      %v396 = vadd.f32 %v355, %v395
      %397 = vmatmul.f32.gmra.mxu0 %v299
      %v398 = vpop.f32.mrf.mxu0
      %v399 = vadd.f32 %v358, %v398
      %400 = vmatmul.f32.gmra.mxu0 %v301
      %v401 = vpop.f32.mrf.mxu0
      %v402 = vadd.f32 %v361, %v401
      %403 = vmatmul.f32.gmra.mxu0 %v303
      %v404 = vpop.f32.mrf.mxu0
      %v405 = vadd.f32 %v364, %v404
      %406 = vmatmul.f32.gmra.mxu0 %v305
      %v407 = vpop.f32.mrf.mxu0
      %v408 = vadd.f32 %v367, %v407
      %409 = vmatmul.f32.gmra.mxu0 %v307
      %v410 = vpop.f32.mrf.mxu0
      %v411 = vadd.f32 %v370, %v410
      %412 = vmatmul.f32.gmra.mxu0 %v309
      %v413 = vpop.f32.mrf.mxu0
      %v414 = vadd.f32 %v373, %v413
      %415 = vdwg.mxu0
      %424 = vrot.lane.b32.xlu0 %v393, 1
      %v425 = vpop.permute.xlu0 %424
      %426 = vrot.lane.b32.xlu0 %v396, 1
      %v427 = vpop.permute.xlu0 %426
      %428 = vrot.lane.b32.xlu0 %v399, 1
      %v429 = vpop.permute.xlu0 %428
      %430 = vrot.lane.b32.xlu0 %v402, 1
      %v431 = vpop.permute.xlu0 %430
      %432 = vrot.lane.b32.xlu0 %v405, 1
      %v433 = vpop.permute.xlu0 %432
      %434 = vrot.lane.b32.xlu0 %v408, 1
      %v435 = vpop.permute.xlu0 %434
      %436 = vrot.lane.b32.xlu0 %v411, 1
      %v437 = vpop.permute.xlu0 %436
      %438 = vrot.lane.b32.xlu0 %v414, 1
      %v439 = vpop.permute.xlu0 %438
      %vm448 = vcmask 7168
      %v449 = vsel %vm448, %v312, %v425
      %v450 = vsel %vm448, %v315, %v427
      %v451 = vsel %vm448, %v318, %v429
      %v452 = vsel %vm448, %v321, %v431
      %v453 = vsel %vm448, %v324, %v433
      %v454 = vsel %vm448, %v327, %v435
      %v455 = vsel %vm448, %v330, %v437
      %v456 = vsel %vm448, %v333, %v439
      %vm457 = vcmask 523264
      %v459 = vsel %vm457, %v253, 0
      %461 = vmatpush.msra.mxu0 0.0
      %462 = vmatpush.msra.mxu0 0.0
      %463 = vmatpush.msra.mxu0 0.0
      %464 = vmatpush.msra.mxu0 0.0
      %465 = vmatpush.msra.mxu0 0.0
      %466 = vmatpush.msra.mxu0 0.0
      %467 = vmatpush.msra.mxu0 0.0
      %468 = vmatpush.msra.mxu0 0.0
      %469 = vmatpush.msra.mxu0 %v456
      %470 = vmatpush.msra.mxu0 %v455
      %471 = vmatpush.msra.mxu0 %v454
      %472 = vmatpush.msra.mxu0 %v453
      %473 = vmatpush.msra.mxu0 %v452
      %474 = vmatpush.msra.mxu0 %v451
      %475 = vmatpush.msra.mxu0 %v450
      %476 = vmatpush.msra.mxu0 %v449
      %477 = vmatmul.f32.gmra.mxu0 %v459
      %v478 = vpop.f32.mrf.mxu0
      %v479 = vadd.f32 0.0, %v478
      %480 = vdwg.mxu0
      %v481 = vmax.f32 %v479, 0.0
      %vm482 = vcmask 31744
      %v484 = vsel %vm482, %v254, 0
      %v487 = vsel %vm482, %v255, 0
      %v490 = vsel %vm482, %v256, 0
      %v493 = vsel %vm482, %v257, 0
      %v496 = vsel %vm482, %v258, 0
      %v499 = vsel %vm482, %v259, 0
      %v502 = vsel %vm482, %v260, 0
      %v505 = vsel %vm482, %v261, 0
      %vm507 = vcmask 1043456
      %v509 = vsel %vm507, %v481, 0
      %511 = vmatpush.msra.mxu0 0.0
      %512 = vmatpush.msra.mxu0 0.0
      %513 = vmatpush.msra.mxu0 0.0
      %514 = vmatpush.msra.mxu0 0.0
      %515 = vmatpush.msra.mxu0 0.0
      %516 = vmatpush.msra.mxu0 0.0
      %517 = vmatpush.msra.mxu0 0.0
      %518 = vmatpush.msra.mxu0 0.0
      %519 = vmatpush.msra.mxu0 0.0
      %520 = vmatpush.msra.mxu0 0.0
      %521 = vmatpush.msra.mxu0 0.0
      %522 = vmatpush.msra.mxu0 0.0
      %523 = vmatpush.msra.mxu0 0.0
      %524 = vmatpush.msra.mxu0 0.0
      %525 = vmatpush.msra.mxu0 0.0
      %526 = vmatpush.msra.mxu0 %v509
      %527 = vmatmul.f32.gmra.mxu0 %v484
      %v528 = vpop.f32.mrf.mxu0
      %v529 = vadd.f32 0.0, %v528
      %530 = vmatmul.f32.gmra.mxu0 %v487
      %v531 = vpop.f32.mrf.mxu0
      %v532 = vadd.f32 0.0, %v531
      %533 = vmatmul.f32.gmra.mxu0 %v490
      %v534 = vpop.f32.mrf.mxu0
      %v535 = vadd.f32 0.0, %v534
      %536 = vmatmul.f32.gmra.mxu0 %v493
      %v537 = vpop.f32.mrf.mxu0
      %v538 = vadd.f32 0.0, %v537
      %539 = vmatmul.f32.gmra.mxu0 %v496
      %v540 = vpop.f32.mrf.mxu0
      %v541 = vadd.f32 0.0, %v540
      %542 = vmatmul.f32.gmra.mxu0 %v499
      %v543 = vpop.f32.mrf.mxu0
      %v544 = vadd.f32 0.0, %v543
      %545 = vmatmul.f32.gmra.mxu0 %v502
      %v546 = vpop.f32.mrf.mxu0
      %v547 = vadd.f32 0.0, %v546
      %548 = vmatmul.f32.gmra.mxu0 %v505
      %v549 = vpop.f32.mrf.mxu0
      %v550 = vadd.f32 0.0, %v549
      %551 = vdwg.mxu0
      %560 = vrot.lane.b32.xlu0 %v529, 127
      %v561 = vpop.permute.xlu0 %560
      %562 = vrot.lane.b32.xlu0 %v532, 127
      %v563 = vpop.permute.xlu0 %562
      %564 = vrot.lane.b32.xlu0 %v535, 127
      %v565 = vpop.permute.xlu0 %564
      %566 = vrot.lane.b32.xlu0 %v538, 127
      %v567 = vpop.permute.xlu0 %566
      %568 = vrot.lane.b32.xlu0 %v541, 127
      %v569 = vpop.permute.xlu0 %568
      %570 = vrot.lane.b32.xlu0 %v544, 127
      %v571 = vpop.permute.xlu0 %570
      %572 = vrot.lane.b32.xlu0 %v547, 127
      %v573 = vpop.permute.xlu0 %572
      %574 = vrot.lane.b32.xlu0 %v550, 127
      %v575 = vpop.permute.xlu0 %574
      %v584 = vadd.f32 %v529, %v561
      %v585 = vadd.f32 %v532, %v563
      %v586 = vadd.f32 %v535, %v565
      %v587 = vadd.f32 %v538, %v567
      %v588 = vadd.f32 %v541, %v569
      %v589 = vadd.f32 %v544, %v571
      %v590 = vadd.f32 %v547, %v573
      %v591 = vadd.f32 %v550, %v575
      %v592 = vxor.u32 %v584, 2147483648
      %v593 = vxor.u32 %v585, 2147483648
      %v594 = vxor.u32 %v586, 2147483648
      %v595 = vxor.u32 %v587, 2147483648
      %v596 = vxor.u32 %v588, 2147483648
      %v597 = vxor.u32 %v589, 2147483648
      %v598 = vxor.u32 %v590, 2147483648
      %v599 = vxor.u32 %v591, 2147483648
      %v600 = vmul.f32 %v592, 1.442695
      %v601 = vpow.pop %v600
      %v602 = vmul.f32 %v593, 1.442695
      %v603 = vpow.pop %v602
      %v604 = vmul.f32 %v594, 1.442695
      %v605 = vpow.pop %v604
      %v606 = vmul.f32 %v595, 1.442695
      %v607 = vpow.pop %v606
      %v608 = vmul.f32 %v596, 1.442695
      %v609 = vpow.pop %v608
      %v610 = vmul.f32 %v597, 1.442695
      %v611 = vpow.pop %v610
      %v612 = vmul.f32 %v598, 1.442695
      %v613 = vpow.pop %v612
      %v614 = vmul.f32 %v599, 1.442695
      %v615 = vpow.pop %v614
      %v616 = vadd.f32 %v601, 1.0
      %v617 = vadd.f32 %v603, 1.0
      %v618 = vadd.f32 %v605, 1.0
      %v619 = vadd.f32 %v607, 1.0
      %v620 = vadd.f32 %v609, 1.0
      %v621 = vadd.f32 %v611, 1.0
      %v622 = vadd.f32 %v613, 1.0
      %v623 = vadd.f32 %v615, 1.0
      %v624 = vrcp.pop %v616
      %v625 = vmul.f32 %v616, %v624
      %v626 = vsub.f32 1.0, %v625
      %v627 = vmul.f32 %v624, %v626
      %v628 = vadd.f32 %v624, %v627
      %vm629 = vweird.f32 %v616
      %vm630 = vweird.f32 %v624
      %vm631 = vmor %vm629, %vm630
      %v632 = vsel %vm631, %v624, %v628
      %v633 = vand.u32 2147483647, %v616
      %vm634 = vcmp.eq.f32.partialorder %v633, 8.507059e+37
      %v635 = vand.u32 %v616, 2147483648
      %v636 = vor.u32 1.1754944e-38, %v635
      %v637 = vsel %vm634, %v636, %v632
      %v638 = vmul.f32 1.0, %v637
      %v639 = vrcp.pop %v617
      %v640 = vmul.f32 %v617, %v639
      %v641 = vsub.f32 1.0, %v640
      %v642 = vmul.f32 %v639, %v641
      %v643 = vadd.f32 %v639, %v642
      %vm644 = vweird.f32 %v617
      %vm645 = vweird.f32 %v639
      %vm646 = vmor %vm644, %vm645
      %v647 = vsel %vm646, %v639, %v643
      %v648 = vand.u32 2147483647, %v617
      %vm649 = vcmp.eq.f32.partialorder %v648, 8.507059e+37
      %v650 = vand.u32 %v617, 2147483648
      %v651 = vor.u32 1.1754944e-38, %v650
      %v652 = vsel %vm649, %v651, %v647
      %v653 = vmul.f32 1.0, %v652
      %v654 = vrcp.pop %v618
      %v655 = vmul.f32 %v618, %v654
      %v656 = vsub.f32 1.0, %v655
      %v657 = vmul.f32 %v654, %v656
      %v658 = vadd.f32 %v654, %v657
      %vm659 = vweird.f32 %v618
      %vm660 = vweird.f32 %v654
      %vm661 = vmor %vm659, %vm660
      %v662 = vsel %vm661, %v654, %v658
      %v663 = vand.u32 2147483647, %v618
      %vm664 = vcmp.eq.f32.partialorder %v663, 8.507059e+37
      %v665 = vand.u32 %v618, 2147483648
      %v666 = vor.u32 1.1754944e-38, %v665
      %v667 = vsel %vm664, %v666, %v662
      %v668 = vmul.f32 1.0, %v667
      %v669 = vrcp.pop %v619
      %v670 = vmul.f32 %v619, %v669
      %v671 = vsub.f32 1.0, %v670
      %v672 = vmul.f32 %v669, %v671
      %v673 = vadd.f32 %v669, %v672
      %vm674 = vweird.f32 %v619
      %vm675 = vweird.f32 %v669
      %vm676 = vmor %vm674, %vm675
      %v677 = vsel %vm676, %v669, %v673
      %v678 = vand.u32 2147483647, %v619
      %vm679 = vcmp.eq.f32.partialorder %v678, 8.507059e+37
      %v680 = vand.u32 %v619, 2147483648
      %v681 = vor.u32 1.1754944e-38, %v680
      %v682 = vsel %vm679, %v681, %v677
      %v683 = vmul.f32 1.0, %v682
      %v684 = vrcp.pop %v620
      %v685 = vmul.f32 %v620, %v684
      %v686 = vsub.f32 1.0, %v685
      %v687 = vmul.f32 %v684, %v686
      %v688 = vadd.f32 %v684, %v687
      %vm689 = vweird.f32 %v620
      %vm690 = vweird.f32 %v684
      %vm691 = vmor %vm689, %vm690
      %v692 = vsel %vm691, %v684, %v688
      %v693 = vand.u32 2147483647, %v620
      %vm694 = vcmp.eq.f32.partialorder %v693, 8.507059e+37
      %v695 = vand.u32 %v620, 2147483648
      %v696 = vor.u32 1.1754944e-38, %v695
      %v697 = vsel %vm694, %v696, %v692
      %v698 = vmul.f32 1.0, %v697
      %v699 = vrcp.pop %v621
      %v700 = vmul.f32 %v621, %v699
      %v701 = vsub.f32 1.0, %v700
      %v702 = vmul.f32 %v699, %v701
      %v703 = vadd.f32 %v699, %v702
      %vm704 = vweird.f32 %v621
      %vm705 = vweird.f32 %v699
      %vm706 = vmor %vm704, %vm705
      %v707 = vsel %vm706, %v699, %v703
      %v708 = vand.u32 2147483647, %v621
      %vm709 = vcmp.eq.f32.partialorder %v708, 8.507059e+37
      %v710 = vand.u32 %v621, 2147483648
      %v711 = vor.u32 1.1754944e-38, %v710
      %v712 = vsel %vm709, %v711, %v707
      %v713 = vmul.f32 1.0, %v712
      %v714 = vrcp.pop %v622
      %v715 = vmul.f32 %v622, %v714
      %v716 = vsub.f32 1.0, %v715
      %v717 = vmul.f32 %v714, %v716
      %v718 = vadd.f32 %v714, %v717
      %vm719 = vweird.f32 %v622
      %vm720 = vweird.f32 %v714
      %vm721 = vmor %vm719, %vm720
      %v722 = vsel %vm721, %v714, %v718
      %v723 = vand.u32 2147483647, %v622
      %vm724 = vcmp.eq.f32.partialorder %v723, 8.507059e+37
      %v725 = vand.u32 %v622, 2147483648
      %v726 = vor.u32 1.1754944e-38, %v725
      %v727 = vsel %vm724, %v726, %v722
      %v728 = vmul.f32 1.0, %v727
      %v729 = vrcp.pop %v623
      %v730 = vmul.f32 %v623, %v729
      %v731 = vsub.f32 1.0, %v730
      %v732 = vmul.f32 %v729, %v731
      %v733 = vadd.f32 %v729, %v732
      %vm734 = vweird.f32 %v623
      %vm735 = vweird.f32 %v729
      %vm736 = vmor %vm734, %vm735
      %v737 = vsel %vm736, %v729, %v733
      %v738 = vand.u32 2147483647, %v623
      %vm739 = vcmp.eq.f32.partialorder %v738, 8.507059e+37
      %v740 = vand.u32 %v623, 2147483648
      %v741 = vor.u32 1.1754944e-38, %v740
      %v742 = vsel %vm739, %v741, %v737
      %v743 = vmul.f32 1.0, %v742
      %745 = vset.pattern.permute.xlu0 0
      %746 = vperm.xlu0 %745, %v638
      %v747 = vpop.permute.xlu0 %746
      %750 = vset.pattern.permute.xlu0 0
      %751 = vperm.xlu0 %750, %v653
      %v752 = vpop.permute.xlu0 %751
      %755 = vset.pattern.permute.xlu0 0
      %756 = vperm.xlu0 %755, %v668
      %v757 = vpop.permute.xlu0 %756
      %760 = vset.pattern.permute.xlu0 0
      %761 = vperm.xlu0 %760, %v683
      %v762 = vpop.permute.xlu0 %761
      %765 = vset.pattern.permute.xlu0 0
      %766 = vperm.xlu0 %765, %v698
      %v767 = vpop.permute.xlu0 %766
      %770 = vset.pattern.permute.xlu0 0
      %771 = vperm.xlu0 %770, %v713
      %v772 = vpop.permute.xlu0 %771
      %775 = vset.pattern.permute.xlu0 0
      %776 = vperm.xlu0 %775, %v728
      %v777 = vpop.permute.xlu0 %776
      %780 = vset.pattern.permute.xlu0 0
      %781 = vperm.xlu0 %780, %v743
      %v782 = vpop.permute.xlu0 %781
      %v784 = vmul.f32 %v294, %v747
      %v785 = vmul.f32 %v295, %v747
      %v786 = vmul.f32 %v296, %v752
      %v787 = vmul.f32 %v297, %v752
      %v788 = vmul.f32 %v298, %v757
      %v789 = vmul.f32 %v299, %v757
      %v790 = vmul.f32 %v300, %v762
      %v791 = vmul.f32 %v301, %v762
      %v792 = vmul.f32 %v302, %v767
      %v793 = vmul.f32 %v303, %v767
      %v794 = vmul.f32 %v304, %v772
      %v795 = vmul.f32 %v305, %v772
      %v796 = vmul.f32 %v306, %v777
      %v797 = vmul.f32 %v307, %v777
      %v798 = vmul.f32 %v308, %v782
      %v799 = vmul.f32 %v309, %v782
      %v800 = vmax.f32 %v784, %v788
      %v801 = vmax.f32 %v786, %v790
      %v802 = vmax.f32 %v800, %v792
      %v803 = vmax.f32 %v801, %v794
      %v804 = vmax.f32 %v802, %v796
      %v805 = vmax.f32 %v803, %v798
      %v806 = vmax.f32 %v804, %v805
      %v807 = vrot.slane %v806, 4
      %v808 = vmax.f32 %v806, %v807
      %v809 = vrot.slane %v808, 2
      %v810 = vmax.f32 %v808, %v809
      %v811 = vrot.slane %v810, 1
      %v812 = vmax.f32 %v810, %v811
      %v813 = vmax.f32 %v785, %v789
      %v814 = vmax.f32 %v787, %v791
      %v815 = vmax.f32 %v813, %v793
      %v816 = vmax.f32 %v814, %v795
      %v817 = vmax.f32 %v815, %v797
      %v818 = vmax.f32 %v816, %v799
      %v819 = vmax.f32 %v817, %v818
      %v820 = vrot.slane %v819, 4
      %v821 = vmax.f32 %v819, %v820
      %v822 = vrot.slane %v821, 2
      %v823 = vmax.f32 %v821, %v822
      %v824 = vrot.slane %v823, 1
      %v825 = vmax.f32 %v823, %v824
      %v827 = vsel %vm457, 0.015625, 0
      %829 = vmatpush.msra.mxu0 0.0
      %830 = vmatpush.msra.mxu0 0.0
      %831 = vmatpush.msra.mxu0 0.0
      %832 = vmatpush.msra.mxu0 0.0
      %833 = vmatpush.msra.mxu0 0.0
      %834 = vmatpush.msra.mxu0 0.0
      %835 = vmatpush.msra.mxu0 0.0
      %836 = vmatpush.msra.mxu0 0.0
      %837 = vmatpush.msra.mxu0 %v798
      %838 = vmatpush.msra.mxu0 %v796
      %839 = vmatpush.msra.mxu0 %v794
      %840 = vmatpush.msra.mxu0 %v792
      %841 = vmatpush.msra.mxu0 %v790
      %842 = vmatpush.msra.mxu0 %v788
      %843 = vmatpush.msra.mxu0 %v786
      %844 = vmatpush.msra.mxu0 %v784
      %845 = vmatmul.f32.gmra.mxu0 %v827
      %v846 = vpop.f32.mrf.mxu0
      %v847 = vadd.f32 0.0, %v846
      %848 = vdwg.mxu0
      %849 = vmatpush.msra.mxu0 0.0
      %850 = vmatpush.msra.mxu0 0.0
      %851 = vmatpush.msra.mxu0 0.0
      %852 = vmatpush.msra.mxu0 0.0
      %853 = vmatpush.msra.mxu0 0.0
      %854 = vmatpush.msra.mxu0 0.0
      %855 = vmatpush.msra.mxu0 0.0
      %856 = vmatpush.msra.mxu0 0.0
      %857 = vmatpush.msra.mxu0 %v799
      %858 = vmatpush.msra.mxu0 %v797
      %859 = vmatpush.msra.mxu0 %v795
      %860 = vmatpush.msra.mxu0 %v793
      %861 = vmatpush.msra.mxu0 %v791
      %862 = vmatpush.msra.mxu0 %v789
      %863 = vmatpush.msra.mxu0 %v787
      %864 = vmatpush.msra.mxu0 %v785
      %865 = vmatmul.f32.gmra.mxu0 %v827
      %v866 = vpop.f32.mrf.mxu0
      %v867 = vadd.f32 0.0, %v866
      %868 = vdwg.mxu0
      %v869 = vld [vmem:[%s3] sm:$0xff]
      %v870 = vld [vmem:[%s3 + $0x8] sm:$0xff]
      %v871 = vld [vmem:[%s3 + $0x10] sm:$0xff]
      %v872 = vld [vmem:[%s3 + $0x18] sm:$0xff]
      %v873 = vld [vmem:[%s3 + $0x20] sm:$0xff]
      %v874 = vld [vmem:[%s3 + $0x28] sm:$0xff]
      %v875 = vld [vmem:[%s3 + $0x30] sm:$0xff]
      %v876 = vld [vmem:[%s3 + $0x38] sm:$0xff]
      %v877 = vld [vmem:[%s3 + $0x40] sm:$0xff]
      %v878 = vld [vmem:[%s3 + $0x48] sm:$0xff]
      %v879 = vld [vmem:[%s3 + $0x50] sm:$0xff]
      %v880 = vld [vmem:[%s3 + $0x58] sm:$0xff]
      %v881 = vld [vmem:[%s3 + $0x60] sm:$0xff]
      %v882 = vld [vmem:[%s3 + $0x68] sm:$0xff]
      %v883 = vld [vmem:[%s3 + $0x70] sm:$0xff]
      %v884 = vld [vmem:[%s3 + $0x78] sm:$0xff]
      %v885 = vld [vmem:[%s3 + $0x80] sm:$0xff]
      %v886 = vld [vmem:[%s3 + $0x88] sm:$0xff]
      %v887 = vld [vmem:[%s3 + $0x90] sm:$0xff]
      %v888 = vld [vmem:[%s3 + $0x98] sm:$0xff]
      %v889 = vld [vmem:[%s3 + $0xa0] sm:$0xff]
      %v890 = vld [vmem:[%s3 + $0xa8] sm:$0xff]
      %v891 = vld [vmem:[%s3 + $0xb0] sm:$0xff]
      %v892 = vld [vmem:[%s3 + $0xb8] sm:$0xff]
      %v893 = vld [vmem:[%s3 + $0xc0] sm:$0xff]
      %v894 = vld [vmem:[%s3 + $0xc8] sm:$0xff]
      %v895 = vld [vmem:[%s3 + $0xd0] sm:$0xff]
      %v896 = vld [vmem:[%s3 + $0xd8] sm:$0xff]
      %v897 = vld [vmem:[%s3 + $0xe0] sm:$0xff]
      %v898 = vld [vmem:[%s3 + $0xe8] sm:$0xff]
      %v899 = vld [vmem:[%s3 + $0xf0] sm:$0xff]
      %v900 = vld [vmem:[%s3 + $0xf8] sm:$0xff]
      %v901 = vld [vmem:[%s3 + $0x100] sm:$0xff]
      %v902 = vld [vmem:[%s3 + $0x108] sm:$0xff]
      %v903 = vld [vmem:[%s3 + $0x110] sm:$0xff]
      %v904 = vld [vmem:[%s3 + $0x118] sm:$0xff]
      %v905 = vld [vmem:[%s3 + $0x120] sm:$0xff]
      %v906 = vld [vmem:[%s3 + $0x128] sm:$0xff]
      %v907 = vld [vmem:[%s3 + $0x130] sm:$0xff]
      %v908 = vld [vmem:[%s3 + $0x138] sm:$0xff]
      %v909 = vld [vmem:[%s3 + $0x140] sm:$0xff]
      %v910 = vld [vmem:[%s3 + $0x148] sm:$0xff]
      %v911 = vld [vmem:[%s3 + $0x150] sm:$0xff]
      %v912 = vld [vmem:[%s3 + $0x158] sm:$0xff]
      %v913 = vld [vmem:[%s3 + $0x160] sm:$0xff]
      %v914 = vld [vmem:[%s3 + $0x168] sm:$0xff]
      %v915 = vld [vmem:[%s3 + $0x170] sm:$0xff]
      %v916 = vld [vmem:[%s3 + $0x178] sm:$0xff]
      %v917 = vld [vmem:[%s3 + $0x180] sm:$0xff]
      %v918 = vld [vmem:[%s3 + $0x188] sm:$0xff]
      %v919 = vld [vmem:[%s3 + $0x190] sm:$0xff]
      %v920 = vld [vmem:[%s3 + $0x198] sm:$0xff]
      %v921 = vld [vmem:[%s3 + $0x1a0] sm:$0xff]
      %v922 = vld [vmem:[%s3 + $0x1a8] sm:$0xff]
      %v923 = vld [vmem:[%s3 + $0x1b0] sm:$0xff]
      %v924 = vld [vmem:[%s3 + $0x1b8] sm:$0xff]
      %v925 = vld [vmem:[%s3 + $0x1c0] sm:$0xff]
      %v926 = vld [vmem:[%s3 + $0x1c8] sm:$0xff]
      %v927 = vld [vmem:[%s3 + $0x1d0] sm:$0xff]
      %v928 = vld [vmem:[%s3 + $0x1d8] sm:$0xff]
      %v929 = vld [vmem:[%s3 + $0x1e0] sm:$0xff]
      %v930 = vld [vmem:[%s3 + $0x1e8] sm:$0xff]
      %v931 = vld [vmem:[%s3 + $0x1f0] sm:$0xff]
      %v932 = vld [vmem:[%s3 + $0x1f8] sm:$0xff]
      %s933 = scalar_lea.vmem %s3, 512
      %v934 = vld [vmem:[%s933] sm:$0xff]
      %v935 = vld [vmem:[%s933 + $0x8] sm:$0xff]
      %v936 = vld [vmem:[%s933 + $0x10] sm:$0xff]
      %v937 = vld [vmem:[%s933 + $0x18] sm:$0xff]
      %v938 = vld [vmem:[%s933 + $0x20] sm:$0xff]
      %v939 = vld [vmem:[%s933 + $0x28] sm:$0xff]
      %v940 = vld [vmem:[%s933 + $0x30] sm:$0xff]
      %v941 = vld [vmem:[%s933 + $0x38] sm:$0xff]
      %v942 = vld [vmem:[%s933 + $0x40] sm:$0xff]
      %v943 = vld [vmem:[%s933 + $0x48] sm:$0xff]
      %v944 = vld [vmem:[%s933 + $0x50] sm:$0xff]
      %v945 = vld [vmem:[%s933 + $0x58] sm:$0xff]
      %v946 = vld [vmem:[%s933 + $0x60] sm:$0xff]
      %v947 = vld [vmem:[%s933 + $0x68] sm:$0xff]
      %v948 = vld [vmem:[%s933 + $0x70] sm:$0xff]
      %v949 = vld [vmem:[%s933 + $0x78] sm:$0xff]
      %v950 = vld [vmem:[%s933 + $0x80] sm:$0xff]
      %v951 = vld [vmem:[%s933 + $0x88] sm:$0xff]
      %v952 = vld [vmem:[%s933 + $0x90] sm:$0xff]
      %v953 = vld [vmem:[%s933 + $0x98] sm:$0xff]
      %v954 = vld [vmem:[%s933 + $0xa0] sm:$0xff]
      %v955 = vld [vmem:[%s933 + $0xa8] sm:$0xff]
      %v956 = vld [vmem:[%s933 + $0xb0] sm:$0xff]
      %v957 = vld [vmem:[%s933 + $0xb8] sm:$0xff]
      %v958 = vld [vmem:[%s933 + $0xc0] sm:$0xff]
      %v959 = vld [vmem:[%s933 + $0xc8] sm:$0xff]
      %v960 = vld [vmem:[%s933 + $0xd0] sm:$0xff]
      %v961 = vld [vmem:[%s933 + $0xd8] sm:$0xff]
      %v962 = vld [vmem:[%s933 + $0xe0] sm:$0xff]
      %v963 = vld [vmem:[%s933 + $0xe8] sm:$0xff]
      %v964 = vld [vmem:[%s933 + $0xf0] sm:$0xff]
      %v965 = vld [vmem:[%s933 + $0xf8] sm:$0xff]
      %v966 = vld [vmem:[%s933 + $0x100] sm:$0xff]
      %v967 = vld [vmem:[%s933 + $0x108] sm:$0xff]
      %v968 = vld [vmem:[%s933 + $0x110] sm:$0xff]
      %v969 = vld [vmem:[%s933 + $0x118] sm:$0xff]
      %v970 = vld [vmem:[%s933 + $0x120] sm:$0xff]
      %v971 = vld [vmem:[%s933 + $0x128] sm:$0xff]
      %v972 = vld [vmem:[%s933 + $0x130] sm:$0xff]
      %v973 = vld [vmem:[%s933 + $0x138] sm:$0xff]
      %v974 = vld [vmem:[%s933 + $0x140] sm:$0xff]
      %v975 = vld [vmem:[%s933 + $0x148] sm:$0xff]
      %v976 = vld [vmem:[%s933 + $0x150] sm:$0xff]
      %v977 = vld [vmem:[%s933 + $0x158] sm:$0xff]
      %v978 = vld [vmem:[%s933 + $0x160] sm:$0xff]
      %v979 = vld [vmem:[%s933 + $0x168] sm:$0xff]
      %v980 = vld [vmem:[%s933 + $0x170] sm:$0xff]
      %v981 = vld [vmem:[%s933 + $0x178] sm:$0xff]
      %v982 = vld [vmem:[%s933 + $0x180] sm:$0xff]
      %v983 = vld [vmem:[%s933 + $0x188] sm:$0xff]
      %v984 = vld [vmem:[%s933 + $0x190] sm:$0xff]
      %v985 = vld [vmem:[%s933 + $0x198] sm:$0xff]
      %v986 = vld [vmem:[%s933 + $0x1a0] sm:$0xff]
      %v987 = vld [vmem:[%s933 + $0x1a8] sm:$0xff]
      %v988 = vld [vmem:[%s933 + $0x1b0] sm:$0xff]
      %v989 = vld [vmem:[%s933 + $0x1b8] sm:$0xff]
      %v990 = vld [vmem:[%s933 + $0x1c0] sm:$0xff]
      %v991 = vld [vmem:[%s933 + $0x1c8] sm:$0xff]
      %v992 = vld [vmem:[%s933 + $0x1d0] sm:$0xff]
      %v993 = vld [vmem:[%s933 + $0x1d8] sm:$0xff]
      %v994 = vld [vmem:[%s933 + $0x1e0] sm:$0xff]
      %v995 = vld [vmem:[%s933 + $0x1e8] sm:$0xff]
      %v996 = vld [vmem:[%s933 + $0x1f0] sm:$0xff]
      %v997 = vld [vmem:[%s933 + $0x1f8] sm:$0xff]
      %998 = vmatpush.msra.mxu0 %v964
      %999 = vmatpush.msra.mxu0 %v962
      %1000 = vmatpush.msra.mxu0 %v960
      %1001 = vmatpush.msra.mxu0 %v958
      %1002 = vmatpush.msra.mxu0 %v956
      %1003 = vmatpush.msra.mxu0 %v954
      %1004 = vmatpush.msra.mxu0 %v952
      %1005 = vmatpush.msra.mxu0 %v950
      %1006 = vmatpush.msra.mxu0 %v948
      %1007 = vmatpush.msra.mxu0 %v946
      %1008 = vmatpush.msra.mxu0 %v944
      %1009 = vmatpush.msra.mxu0 %v942
      %1010 = vmatpush.msra.mxu0 %v940
      %1011 = vmatpush.msra.mxu0 %v938
      %1012 = vmatpush.msra.mxu0 %v936
      %1013 = vmatpush.msra.mxu0 %v934
      %1014 = vmatmul.f32.gmra.mxu0 %v847
      %v1015 = vpop.f32.mrf.mxu0
      %v1016 = vadd.f32 0.0, %v1015
      %1017 = vdwg.mxu0
      %1018 = vmatpush.msra.mxu0 %v996
      %1019 = vmatpush.msra.mxu0 %v994
      %1020 = vmatpush.msra.mxu0 %v992
      %1021 = vmatpush.msra.mxu0 %v990
      %1022 = vmatpush.msra.mxu0 %v988
      %1023 = vmatpush.msra.mxu0 %v986
      %1024 = vmatpush.msra.mxu0 %v984
      %1025 = vmatpush.msra.mxu0 %v982
      %1026 = vmatpush.msra.mxu0 %v980
      %1027 = vmatpush.msra.mxu0 %v978
      %1028 = vmatpush.msra.mxu0 %v976
      %1029 = vmatpush.msra.mxu0 %v974
      %1030 = vmatpush.msra.mxu0 %v972
      %1031 = vmatpush.msra.mxu0 %v970
      %1032 = vmatpush.msra.mxu0 %v968
      %1033 = vmatpush.msra.mxu0 %v966
      %1034 = vmatmul.f32.gmra.mxu0 %v867
      %v1035 = vpop.f32.mrf.mxu0
      %v1036 = vadd.f32 %v1016, %v1035
      %1037 = vdwg.mxu0
      %1038 = vmatpush.msra.mxu0 %v965
      %1039 = vmatpush.msra.mxu0 %v963
      %1040 = vmatpush.msra.mxu0 %v961
      %1041 = vmatpush.msra.mxu0 %v959
      %1042 = vmatpush.msra.mxu0 %v957
      %1043 = vmatpush.msra.mxu0 %v955
      %1044 = vmatpush.msra.mxu0 %v953
      %1045 = vmatpush.msra.mxu0 %v951
      %1046 = vmatpush.msra.mxu0 %v949
      %1047 = vmatpush.msra.mxu0 %v947
      %1048 = vmatpush.msra.mxu0 %v945
      %1049 = vmatpush.msra.mxu0 %v943
      %1050 = vmatpush.msra.mxu0 %v941
      %1051 = vmatpush.msra.mxu0 %v939
      %1052 = vmatpush.msra.mxu0 %v937
      %1053 = vmatpush.msra.mxu0 %v935
      %1054 = vmatmul.f32.gmra.mxu0 %v847
      %v1055 = vpop.f32.mrf.mxu0
      %v1056 = vadd.f32 0.0, %v1055
      %1057 = vdwg.mxu0
      %1058 = vmatpush.msra.mxu0 %v997
      %1059 = vmatpush.msra.mxu0 %v995
      %1060 = vmatpush.msra.mxu0 %v993
      %1061 = vmatpush.msra.mxu0 %v991
      %1062 = vmatpush.msra.mxu0 %v989
      %1063 = vmatpush.msra.mxu0 %v987
      %1064 = vmatpush.msra.mxu0 %v985
      %1065 = vmatpush.msra.mxu0 %v983
      %1066 = vmatpush.msra.mxu0 %v981
      %1067 = vmatpush.msra.mxu0 %v979
      %1068 = vmatpush.msra.mxu0 %v977
      %1069 = vmatpush.msra.mxu0 %v975
      %1070 = vmatpush.msra.mxu0 %v973
      %1071 = vmatpush.msra.mxu0 %v971
      %1072 = vmatpush.msra.mxu0 %v969
      %1073 = vmatpush.msra.mxu0 %v967
      %1074 = vmatmul.f32.gmra.mxu0 %v867
      %v1075 = vpop.f32.mrf.mxu0
      %v1076 = vadd.f32 %v1056, %v1075
      %1077 = vdwg.mxu0
      %1078 = vmatpush.msra.mxu0 %v899
      %1079 = vmatpush.msra.mxu0 %v897
      %1080 = vmatpush.msra.mxu0 %v895
      %1081 = vmatpush.msra.mxu0 %v893
      %1082 = vmatpush.msra.mxu0 %v891
      %1083 = vmatpush.msra.mxu0 %v889
      %1084 = vmatpush.msra.mxu0 %v887
      %1085 = vmatpush.msra.mxu0 %v885
      %1086 = vmatpush.msra.mxu0 %v883
      %1087 = vmatpush.msra.mxu0 %v881
      %1088 = vmatpush.msra.mxu0 %v879
      %1089 = vmatpush.msra.mxu0 %v877
      %1090 = vmatpush.msra.mxu0 %v875
      %1091 = vmatpush.msra.mxu0 %v873
      %1092 = vmatpush.msra.mxu0 %v871
      %1093 = vmatpush.msra.mxu0 %v869
      %1094 = vmatmul.f32.gmra.mxu0 %v812
      %v1095 = vpop.f32.mrf.mxu0
      %v1096 = vadd.f32 %v1036, %v1095
      %1097 = vdwg.mxu0
      %1098 = vmatpush.msra.mxu0 %v931
      %1099 = vmatpush.msra.mxu0 %v929
      %1100 = vmatpush.msra.mxu0 %v927
      %1101 = vmatpush.msra.mxu0 %v925
      %1102 = vmatpush.msra.mxu0 %v923
      %1103 = vmatpush.msra.mxu0 %v921
      %1104 = vmatpush.msra.mxu0 %v919
      %1105 = vmatpush.msra.mxu0 %v917
      %1106 = vmatpush.msra.mxu0 %v915
      %1107 = vmatpush.msra.mxu0 %v913
      %1108 = vmatpush.msra.mxu0 %v911
      %1109 = vmatpush.msra.mxu0 %v909
      %1110 = vmatpush.msra.mxu0 %v907
      %1111 = vmatpush.msra.mxu0 %v905
      %1112 = vmatpush.msra.mxu0 %v903
      %1113 = vmatpush.msra.mxu0 %v901
      %1114 = vmatmul.f32.gmra.mxu0 %v825
      %v1115 = vpop.f32.mrf.mxu0
      %v1116 = vadd.f32 %v1096, %v1115
      %1117 = vdwg.mxu0
      %1118 = vmatpush.msra.mxu0 %v900
      %1119 = vmatpush.msra.mxu0 %v898
      %1120 = vmatpush.msra.mxu0 %v896
      %1121 = vmatpush.msra.mxu0 %v894
      %1122 = vmatpush.msra.mxu0 %v892
      %1123 = vmatpush.msra.mxu0 %v890
      %1124 = vmatpush.msra.mxu0 %v888
      %1125 = vmatpush.msra.mxu0 %v886
      %1126 = vmatpush.msra.mxu0 %v884
      %1127 = vmatpush.msra.mxu0 %v882
      %1128 = vmatpush.msra.mxu0 %v880
      %1129 = vmatpush.msra.mxu0 %v878
      %1130 = vmatpush.msra.mxu0 %v876
      %1131 = vmatpush.msra.mxu0 %v874
      %1132 = vmatpush.msra.mxu0 %v872
      %1133 = vmatpush.msra.mxu0 %v870
      %1134 = vmatmul.f32.gmra.mxu0 %v812
      %v1135 = vpop.f32.mrf.mxu0
      %v1136 = vadd.f32 %v1076, %v1135
      %1137 = vdwg.mxu0
      %1138 = vmatpush.msra.mxu0 %v932
      %1139 = vmatpush.msra.mxu0 %v930
      %1140 = vmatpush.msra.mxu0 %v928
      %1141 = vmatpush.msra.mxu0 %v926
      %1142 = vmatpush.msra.mxu0 %v924
      %1143 = vmatpush.msra.mxu0 %v922
      %1144 = vmatpush.msra.mxu0 %v920
      %1145 = vmatpush.msra.mxu0 %v918
      %1146 = vmatpush.msra.mxu0 %v916
      %1147 = vmatpush.msra.mxu0 %v914
      %1148 = vmatpush.msra.mxu0 %v912
      %1149 = vmatpush.msra.mxu0 %v910
      %1150 = vmatpush.msra.mxu0 %v908
      %1151 = vmatpush.msra.mxu0 %v906
      %1152 = vmatpush.msra.mxu0 %v904
      %1153 = vmatpush.msra.mxu0 %v902
      %1154 = vmatmul.f32.gmra.mxu0 %v825
      %v1155 = vpop.f32.mrf.mxu0
      %v1156 = vadd.f32 %v1136, %v1155
      %1157 = vdwg.mxu0
      %s1158 = sld [smem:[#allocation2]]
      %v1159 = vstv %s1158
      %v1160 = vadd.f32 %v1116, %v1159
      %v1161 = vadd.f32 %v1156, %v1159
      %v1162 = vxor.u32 %v1160, 2147483648
      %v1163 = vxor.u32 %v1161, 2147483648
      %v1164 = vmul.f32 %v1162, 1.442695
      %v1165 = vpow.pop %v1164
      %v1166 = vmul.f32 %v1163, 1.442695
      %v1167 = vpow.pop %v1166
      %v1168 = vadd.f32 %v1165, 1.0
      %v1169 = vadd.f32 %v1167, 1.0
      %v1170 = vrcp.pop %v1168
      %v1171 = vmul.f32 %v1168, %v1170
      %v1172 = vsub.f32 1.0, %v1171
      %v1173 = vmul.f32 %v1170, %v1172
      %v1174 = vadd.f32 %v1170, %v1173
      %vm1175 = vweird.f32 %v1168
      %vm1176 = vweird.f32 %v1170
      %vm1177 = vmor %vm1175, %vm1176
      %v1178 = vsel %vm1177, %v1170, %v1174
      %v1179 = vand.u32 2147483647, %v1168
      %vm1180 = vcmp.eq.f32.partialorder %v1179, 8.507059e+37
      %v1181 = vand.u32 %v1168, 2147483648
      %v1182 = vor.u32 1.1754944e-38, %v1181
      %v1183 = vsel %vm1180, %v1182, %v1178
      %v1184 = vmul.f32 1.0, %v1183
      %v1185 = vrcp.pop %v1169
      %v1186 = vmul.f32 %v1169, %v1185
      %v1187 = vsub.f32 1.0, %v1186
      %v1188 = vmul.f32 %v1185, %v1187
      %v1189 = vadd.f32 %v1185, %v1188
      %vm1190 = vweird.f32 %v1169
      %vm1191 = vweird.f32 %v1185
      %vm1192 = vmor %vm1190, %vm1191
      %v1193 = vsel %vm1192, %v1185, %v1189
      %v1194 = vand.u32 2147483647, %v1169
      %vm1195 = vcmp.eq.f32.partialorder %v1194, 8.507059e+37
      %v1196 = vand.u32 %v1169, 2147483648
      %v1197 = vor.u32 1.1754944e-38, %v1196
      %v1198 = vsel %vm1195, %v1197, %v1193
      %v1199 = vmul.f32 1.0, %v1198
      %v1200 = vperm.slane %v1184, 0
      %v1201 = vperm.slane %v1199, 0
      %v1202 = vmul.f32 %v784, %v1200
      %v1203 = vmul.f32 %v785, %v1201
      %v1204 = vmul.f32 %v786, %v1200
      %v1205 = vmul.f32 %v787, %v1201
      %v1206 = vmul.f32 %v788, %v1200
      %v1207 = vmul.f32 %v789, %v1201
      %v1208 = vmul.f32 %v790, %v1200
      %v1209 = vmul.f32 %v791, %v1201
      %v1210 = vmul.f32 %v792, %v1200
      %v1211 = vmul.f32 %v793, %v1201
      %v1212 = vmul.f32 %v794, %v1200
      %v1213 = vmul.f32 %v795, %v1201
      %v1214 = vmul.f32 %v796, %v1200
      %v1215 = vmul.f32 %v797, %v1201
      %v1216 = vmul.f32 %v798, %v1200
      %v1217 = vmul.f32 %v799, %v1201
      %1218 = vst [vmem:[%s252] sm:$0xff] %v1202
      %1219 = vst [vmem:[%s252 + $0x8] sm:$0xff] %v1203
      %1220 = vst [vmem:[%s252 + $0x10] sm:$0xff] %v1204
      %1221 = vst [vmem:[%s252 + $0x18] sm:$0xff] %v1205
      %1222 = vst [vmem:[%s252 + $0x20] sm:$0xff] %v1206
      %1223 = vst [vmem:[%s252 + $0x28] sm:$0xff] %v1207
      %1224 = vst [vmem:[%s252 + $0x30] sm:$0xff] %v1208
      %1225 = vst [vmem:[%s252 + $0x38] sm:$0xff] %v1209
      %1226 = vst [vmem:[%s252 + $0x40] sm:$0xff] %v1210
      %1227 = vst [vmem:[%s252 + $0x48] sm:$0xff] %v1211
      %1228 = vst [vmem:[%s252 + $0x50] sm:$0xff] %v1212
      %1229 = vst [vmem:[%s252 + $0x58] sm:$0xff] %v1213
      %1230 = vst [vmem:[%s252 + $0x60] sm:$0xff] %v1214
      %1231 = vst [vmem:[%s252 + $0x68] sm:$0xff] %v1215
      %1232 = vst [vmem:[%s252 + $0x70] sm:$0xff] %v1216
      %1233 = vst [vmem:[%s252 + $0x78] sm:$0xff] %v1217
      %p1234 = scmp.lt.s32.totalorder %s18, 1
      %s1235 = scalar_select %p1234, %s18, 1
      %s1236 = smul.addr %s1235, 16
      %s1237 = smul.addr %s1236, 8
      %s1238 = scalar_lea.vmem %s6, %s1237
      // Predicated region
      $region45: #{cbam_forward.1} parent=43 // pred_check
        %p1239 = pneg %p167
      $region46: #{cbam_forward.1} parent=43 // pred_check_branch
        %1241 = sbr.rel (%p1239) target = $region48
      $region47: #{cbam_forward.1} parent=43 // pred_region
        _
      $region48: #{cbam_forward.1} parent=43 // pred_fallthru
        _
    $region44: #{cbam_forward.1} parent=5 // pred_fallthru
      _
    %p1242 = scmp.le.s32.totalorder 2, %s13
    // Predicated region
    $region49: #{cbam_forward.1} parent=5 // pred_check
      %p1243 = pneg %p1242
    $region50: #{cbam_forward.1} parent=5 // pred_check_branch
      %1245 = sbr.rel (%p1243) target = $region52
    $region51: #{cbam_forward.1} parent=5 // pred_region
      %s1246 = ssub.s32 %s13, 2
      // Predicated region
      $region53: #{cbam_forward.1} parent=51 // pred_check
        %p1247 = pneg %p173
      $region54: #{cbam_forward.1} parent=51 // pred_check_branch
        %1249 = sbr.rel (%p1247) target = $region56
      $region55: #{cbam_forward.1} parent=51 // pred_region
        %p1250 = scmp.lt.s32.totalorder %s19, 1
        %s1251 = scalar_select %p1250, %s19, 1
        %s1252 = smul.addr %s1251, 16
        %s1253 = smul.addr %s1252, 8
        %s1254 = scalar_lea.vmem %s6, %s1253
      $region56: #{cbam_forward.1} parent=51 // pred_fallthru
        _
    $region52: #{cbam_forward.1} parent=5 // pred_fallthru
      _
  $region6: #{cbam_forward.1} parent=0 // loop_footer
    %s17 = sadd.s32 1, %s13
  $region7: #{cbam_forward.1} parent=0 // loop_footer_branch
    %12 = sbr.rel target = $region3
  $region8: #{cbam_forward.1} parent=0 // loop_exit
    _

</llo_original>
